<compile_context>
chip_gen: v7x
topology: tpu7x:2x2x1
jax: 0.10.0
libtpu: 0.0.40
codegen_flags: <defaults>
</compile_context>

<pallas_src>
import functools

import jax
import jax.numpy as jnp
from jax.experimental import pallas as pl
from jax.experimental.pallas import tpu as pltpu

EPS = 1e-6
LANE = 128
DEFAULT_MAX_CHUNK = 64 * 1024          # feature elements per chunk (~2 MiB f32 at 8 rows)
VMEM_LIMIT_BYTES = 32 * 1024 * 1024    # explicit, fits v7x's smaller VMEM


def _round_up(v, m):
    return (v + m - 1) // m * m


def _fused_kernel(x_ref, o_ref, *, inv_n):
    # One row-block with the full (padded) feature dim resident.
    # Padded columns are zero, so sum / sum-of-squares with the true 1/n
    # still give exact mean/var.
    x = x_ref[...].astype(jnp.float32)
    s = jnp.sum(x, axis=-1, keepdims=True)
    sq = jnp.sum(x * x, axis=-1, keepdims=True)
    mean = s * inv_n
    var = sq * inv_n - mean * mean
    inv = jax.lax.rsqrt(var + EPS)
    o_ref[...] = ((x - mean) * inv).astype(o_ref.dtype)


def _stats_kernel(x_ref, sum_ref, ssq_ref):
    # Accumulate per-row sum and sum-of-squares across the chunk (k) axis.
    @pl.when(pl.program_id(1) == 0)
    def _():
        sum_ref[...] = jnp.zeros_like(sum_ref)
        ssq_ref[...] = jnp.zeros_like(ssq_ref)

    x = x_ref[...].astype(jnp.float32)
    sum_ref[...] += jnp.sum(x, axis=-1, keepdims=True)
    ssq_ref[...] += jnp.sum(x * x, axis=-1, keepdims=True)


def _norm_kernel(x_ref, sum_ref, ssq_ref, o_ref, *, inv_n):
    x = x_ref[...].astype(jnp.float32)
    mean = sum_ref[...] * inv_n
    var = ssq_ref[...] * inv_n - mean * mean
    inv = jax.lax.rsqrt(var + EPS)
    o_ref[...] = ((x - mean) * inv).astype(o_ref.dtype)


def batch_wrapper(x, same_on_batch: bool = False,
                  max_chunk_elems: int = DEFAULT_MAX_CHUNK):
    """Pallas equivalent of BatchWrapper(tfms=standardize, same_on_batch)."""
    N, C, H, W = x.shape
    D = C * H * W
    if same_on_batch:
        rows, feat = 1, N * D          # one "sample" = whole batch
    else:
        rows, feat = N, D              # per-sample stats

    xf = x.reshape(rows, feat)

    # Row blocking: up to 8 samples per grid step.
    tb = 8 if rows >= 8 else rows
    R = pl.cdiv(rows, tb)
    rows_pad = R * tb

    # Lane-dense feature chunking (chunk is a multiple of 128).
    feat128 = _round_up(feat, LANE)
    chunk = _round_up(min(max(max_chunk_elems, LANE), feat128), LANE)
    K = pl.cdiv(feat128, chunk)
    feat_pad = K * chunk

    if rows_pad != rows or feat_pad != feat:
        xf = jnp.pad(xf, ((0, rows_pad - rows), (0, feat_pad - feat)))

    inv_n = 1.0 / float(feat)
    data_spec = pl.BlockSpec((tb, chunk), lambda r, k: (r, k))
    stats_spec = pl.BlockSpec((tb, 1), lambda r, k: (r, 0))

    if K == 1:
        # Whole (padded) feature dim fits one chunk: fused stats + normalize.
        out = pl.pallas_call(
            functools.partial(_fused_kernel, inv_n=inv_n),
            out_shape=jax.ShapeDtypeStruct((rows_pad, feat_pad), x.dtype),
            grid_spec=pltpu.PrefetchScalarGridSpec(
                num_scalar_prefetch=0,
                grid=(R,),
                in_specs=[pl.BlockSpec((tb, feat_pad), lambda r: (r, 0))],
                out_specs=pl.BlockSpec((tb, feat_pad), lambda r: (r, 0)),
            ),
            compiler_params=pltpu.CompilerParams(
                dimension_semantics=("parallel",),
                vmem_limit_bytes=VMEM_LIMIT_BYTES),
        )(xf)
    else:
        # Pass 1: per-row sum / sum-of-squares over the chunked feature axis.
        sums, ssqs = pl.pallas_call(
            _stats_kernel,
            out_shape=(jax.ShapeDtypeStruct((rows_pad, 1), jnp.float32),
                       jax.ShapeDtypeStruct((rows_pad, 1), jnp.float32)),
            grid_spec=pltpu.PrefetchScalarGridSpec(
                num_scalar_prefetch=0,
                grid=(R, K),
                in_specs=[data_spec],
                out_specs=(stats_spec, stats_spec),
            ),
            compiler_params=pltpu.CompilerParams(
                dimension_semantics=("parallel", "arbitrary"),
                vmem_limit_bytes=VMEM_LIMIT_BYTES),
        )(xf)

        # Pass 2: normalize each chunk from the tiny per-row stats.
        out = pl.pallas_call(
            functools.partial(_norm_kernel, inv_n=inv_n),
            out_shape=jax.ShapeDtypeStruct((rows_pad, feat_pad), x.dtype),
            grid_spec=pltpu.PrefetchScalarGridSpec(
                num_scalar_prefetch=0,
                grid=(R, K),
                in_specs=[data_spec, stats_spec, stats_spec],
                out_specs=data_spec,
            ),
            compiler_params=pltpu.CompilerParams(
                dimension_semantics=("parallel", "parallel"),
                vmem_limit_bytes=VMEM_LIMIT_BYTES),
        )(xf, sums, ssqs)

    return out[:rows, :feat].reshape(N, C, H, W)


def _reference(x, same_on_batch: bool = False):
    def tfms(t):
        t = t.astype(jnp.float32)
        m = jnp.mean(t)
        v = jnp.mean((t - m) ** 2)
        return ((t - m) * jax.lax.rsqrt(v + EPS)).astype(x.dtype)

    if same_on_batch:
        return tfms(x)
    return jnp.stack([tfms(x_i) for x_i in x], axis=0)


if __name__ == "__main__":
    key = jax.random.PRNGKey(0)
    x = jax.random.normal(key, (2, 4, 16, 16), dtype=jnp.float32) * 3.0 + 1.5

    # Fused (single-chunk) path.
    out_per_sample = jax.block_until_ready(batch_wrapper(x, same_on_batch=False))
    out_batch = jax.block_until_ready(batch_wrapper(x, same_on_batch=True))
    # Chunked two-pass path, exercised on the same small input via a tiny chunk.
    out_ps_chunked = jax.block_until_ready(
        batch_wrapper(x, same_on_batch=False, max_chunk_elems=256))
    out_b_chunked = jax.block_until_ready(
        batch_wrapper(x, same_on_batch=True, max_chunk_elems=256))

    ref_ps = _reference(x, same_on_batch=False)
    ref_b = _reference(x, same_on_batch=True)

    assert out_per_sample.shape == x.shape and out_per_sample.dtype == x.dtype
    assert out_batch.shape == x.shape and out_batch.dtype == x.dtype

    for got, ref in ((out_per_sample, ref_ps), (out_ps_chunked, ref_ps),
                     (out_batch, ref_b), (out_b_chunked, ref_b)):
        err = float(jnp.max(jnp.abs(got.astype(jnp.float32) - ref.astype(jnp.float32))))
        assert err < 1e-4, f"max abs err {err}"

    print("KERNEL_OK")
</pallas_src>

<mosaic_0001>
module attributes {stable_mosaic.version = 11 : i64} {
  func.func @_fused_kernel(%arg0: i32, %arg1: memref<2x1024xf32, #tpu.memory_space<vmem>>, %arg2: memref<2x1024xf32, #tpu.memory_space<vmem>>) attributes {dimension_semantics = [#tpu.dimension_semantics<parallel>], iteration_bounds = array<i64: 1>, scalar_prefetch = 0 : i64, scratch_operands = 0 : i64, tpu.core_type = #tpu.core_type<tc>, window_params = [{transform_indices = @transform_0, window_bounds = array<i64: 2, 1024>}, {transform_indices = @transform_1, window_bounds = array<i64: 2, 1024>}]} {
    %c0 = arith.constant 0 : index
    %c0_0 = arith.constant 0 : index
    %0 = vector.load %arg1[%c0, %c0_0] : memref<2x1024xf32, #tpu.memory_space<vmem>>, vector<2x1024xf32>
    %cst = arith.constant dense<0.000000e+00> : vector<2xf32>
    %1 = vector.multi_reduction <add>, %0, %cst [1] : vector<2x1024xf32> to vector<2xf32>
    %2 = vector.shape_cast %1 : vector<2xf32> to vector<2x1xf32>
    %3 = arith.mulf %0, %0 : vector<2x1024xf32>
    %cst_1 = arith.constant dense<0.000000e+00> : vector<2xf32>
    %4 = vector.multi_reduction <add>, %3, %cst_1 [1] : vector<2x1024xf32> to vector<2xf32>
    %5 = vector.shape_cast %4 : vector<2xf32> to vector<2x1xf32>
    %cst_2 = arith.constant 9.765625E-4 : f32
    %6 = vector.broadcast %cst_2 : f32 to vector<2x1xf32>
    %7 = arith.mulf %2, %6 : vector<2x1xf32>
    %cst_3 = arith.constant 9.765625E-4 : f32
    %8 = vector.broadcast %cst_3 : f32 to vector<2x1xf32>
    %9 = arith.mulf %5, %8 : vector<2x1xf32>
    %10 = arith.mulf %7, %7 : vector<2x1xf32>
    %11 = arith.subf %9, %10 : vector<2x1xf32>
    %cst_4 = arith.constant 9.99999997E-7 : f32
    %12 = vector.broadcast %cst_4 : f32 to vector<2x1xf32>
    %13 = arith.addf %11, %12 : vector<2x1xf32>
    %14 = math.rsqrt %13 : vector<2x1xf32>
    %15 = vector.broadcast %7 : vector<2x1xf32> to vector<2x1024xf32>
    %16 = arith.subf %0, %15 : vector<2x1024xf32>
    %17 = vector.broadcast %14 : vector<2x1xf32> to vector<2x1024xf32>
    %18 = arith.mulf %16, %17 : vector<2x1024xf32>
    %c0_5 = arith.constant 0 : index
    %c0_6 = arith.constant 0 : index
    %19 = vector.load %arg2[%c0_5, %c0_6] : memref<2x1024xf32, #tpu.memory_space<vmem>>, vector<2x1024xf32>
    tpu.vector_store %arg2[%c0_5, %c0_6], %18 {strides = array<i32>} : memref<2x1024xf32, #tpu.memory_space<vmem>>, vector<2x1024xf32>,
    return
  }
  func.func @transform_0(%arg0: i32) -> (i32, i32) {
    %c0_i32 = arith.constant 0 : i32
    %c0_i32_0 = arith.constant 0 : i32
    return %arg0, %c0_i32 : i32, i32
  }
  func.func @transform_1(%arg0: i32) -> (i32, i32) {
    %c0_i32 = arith.constant 0 : i32
    %c0_i32_0 = arith.constant 0 : i32
    return %arg0, %c0_i32 : i32, i32
  }
}

</mosaic_0001>

<llo_original>
// kernel: tpu_custom_call.1
$region0: #{tpu_custom_call.1}
  #allocation0 [shape = 'u32[]', space=smem, size = 0x4, offset = 0x4, fixed_abs, tag = 'smem constant byte address 0x4 - core index']
  #allocation1 [shape = 'u32[144,128]{1,0:T(1,128)}', space=vmem, size = 0x12000, scoped, tag = 'internal scratch']
  %s0 = inlined_call_operand.hbm [shape: f32[2,1024], index: 0, kind: input, shape index: {}]
  %s1 = inlined_call_operand.hbm [shape: f32[2,1024], index: 1, kind: output, shape index: {}]
  %s2 = sld [smem:[#allocation0]]
  $region18: #{tpu_custom_call.1} parent=0
    _
  %s4 = ssub.s32 1, %s2
  %s5 = scalar_select 0, %s4, %s2
  $region1: #{tpu_custom_call.1} parent=0
    #allocation2 [shape = 'u8[8192]{0}', space=vmem, size = 0x2000, scoped, tag = 'input window, operand 0, single buffered']
    #allocation3 [shape = 's32[1]{0}', space=sflag, size = 0x4, scoped, tag = 'scoped memory for tpu_custom_call.1']
    #allocation4 [shape = 's32[1]{0}', space=sflag, size = 0x4, scoped, tag = 'scoped memory for tpu_custom_call.1']
    #allocation5 [shape = 'u8[8192]{0}', space=vmem, size = 0x2000, scoped, tag = 'output window, operand 0, single buffered']
    %6 = vsyncpa [#allocation3], 0
    %7 = vsyncpa [#allocation4], 0
    // Predicated region
    $region2: #{tpu_custom_call.1} parent=1 // pred_check
      _
    $region3: #{tpu_custom_call.1} parent=1 // pred_check_branch
      %9 = sbr.rel (0) target = $region5
    $region4: #{tpu_custom_call.1} parent=1 // pred_region
      %s11 = ssub.s32 256, 256
      %12 = vsyncadd [#allocation3], %s11
      %s14 = sshll.u32 [#allocation2], 4
      %s15 = int_to_ptr.vmem [resolvable:$true] %s14
      %17 = dma.hbm_to_vmem [thread:$0]  %s0, 256, %s15, [#allocation3]
    $region5: #{tpu_custom_call.1} parent=1 // pred_fallthru
      _
    // Predicated region
    $region6: #{tpu_custom_call.1} parent=1 // pred_check
      _
    $region7: #{tpu_custom_call.1} parent=1 // pred_check_branch
      %19 = sbr.rel (0) target = $region9
    $region8: #{tpu_custom_call.1} parent=1 // pred_region
      %20 = dma.done [#allocation3], 256
    $region9: #{tpu_custom_call.1} parent=1 // pred_fallthru
      _
    %v21 = vld [vmem:[#allocation2] sm:$0xff]
    %v22 = vld [vmem:[#allocation2 + $0x8] sm:$0xff]
    %v25 = vcombine.high %v21, %v21
    %v27 = vunpack.c.l.s4 1983009808
    %v28 = vunpack.c.0.s8 %v27
    %v29 = vlaneseq
    %v30 = vshrl.u32 %v29, 7
    %v31 = vsub.s32 %v28, %v30
    %v32 = vrot.slane %v21, %v31
    %v34 = vunpack.c.l.s4 1983009808
    %v35 = vunpack.c.0.s8 %v34
    %v36 = vlaneseq
    %v37 = vshrl.u32 %v36, 7
    %v38 = vsub.s32 %v35, %v37
    %v39 = vrot.slane %v25, %v38
    %v40 = vcombine.high %v32, %v32
    %v41 = vcombine.high %v39, %v39
    %v42 = vcombine.high %v22, %v22
    %v44 = vunpack.c.l.s4 1983009808
    %v45 = vunpack.c.0.s8 %v44
    %v46 = vlaneseq
    %v47 = vshrl.u32 %v46, 7
    %v48 = vsub.s32 %v45, %v47
    %v49 = vrot.slane %v22, %v48
    %v51 = vunpack.c.l.s4 1983009808
    %v52 = vunpack.c.0.s8 %v51
    %v53 = vlaneseq
    %v54 = vshrl.u32 %v53, 7
    %v55 = vsub.s32 %v52, %v54
    %v56 = vrot.slane %v42, %v55
    %v57 = vcombine.high %v49, %v49
    %v58 = vcombine.high %v56, %v56
    %vm67 = vcmask 1041408
    %v68 = vsel %vm67, %v32, 0.0
    %v69 = vsel %vm67, %v40, 0.0
    %v70 = vadd.f32 %v68, %v69
    %v71 = vsel %vm67, %v39, 0.0
    %v72 = vadd.f32 %v70, %v71
    %v73 = vsel %vm67, %v41, 0.0
    %v74 = vadd.f32 %v72, %v73
    %v75 = vsel %vm67, %v49, 0.0
    %v76 = vadd.f32 %v74, %v75
    %v77 = vsel %vm67, %v57, 0.0
    %v78 = vadd.f32 %v76, %v77
    %v79 = vsel %vm67, %v56, 0.0
    %v80 = vadd.f32 %v78, %v79
    %v81 = vsel %vm67, %v58, 0.0
    %v82 = vadd.f32 %v80, %v81
    %83 = vadd.xlane.f32.xlu0 %v82
    %v84 = vpop.xlane.xlu0 %83
    %v85 = vmul.f32 %v21, %v21
    %v86 = vmul.f32 %v22, %v22
    %v89 = vcombine.high %v85, %v85
    %v91 = vunpack.c.l.s4 1983009808
    %v92 = vunpack.c.0.s8 %v91
    %v93 = vlaneseq
    %v94 = vshrl.u32 %v93, 7
    %v95 = vsub.s32 %v92, %v94
    %v96 = vrot.slane %v85, %v95
    %v98 = vunpack.c.l.s4 1983009808
    %v99 = vunpack.c.0.s8 %v98
    %v100 = vlaneseq
    %v101 = vshrl.u32 %v100, 7
    %v102 = vsub.s32 %v99, %v101
    %v103 = vrot.slane %v89, %v102
    %v104 = vcombine.high %v96, %v96
    %v105 = vcombine.high %v103, %v103
    %v106 = vcombine.high %v86, %v86
    %v108 = vunpack.c.l.s4 1983009808
    %v109 = vunpack.c.0.s8 %v108
    %v110 = vlaneseq
    %v111 = vshrl.u32 %v110, 7
    %v112 = vsub.s32 %v109, %v111
    %v113 = vrot.slane %v86, %v112
    %v115 = vunpack.c.l.s4 1983009808
    %v116 = vunpack.c.0.s8 %v115
    %v117 = vlaneseq
    %v118 = vshrl.u32 %v117, 7
    %v119 = vsub.s32 %v116, %v118
    %v120 = vrot.slane %v106, %v119
    %v121 = vcombine.high %v113, %v113
    %v122 = vcombine.high %v120, %v120
    %v131 = vsel %vm67, %v96, 0.0
    %v132 = vsel %vm67, %v104, 0.0
    %v133 = vadd.f32 %v131, %v132
    %v134 = vsel %vm67, %v103, 0.0
    %v135 = vadd.f32 %v133, %v134
    %v136 = vsel %vm67, %v105, 0.0
    %v137 = vadd.f32 %v135, %v136
    %v138 = vsel %vm67, %v113, 0.0
    %v139 = vadd.f32 %v137, %v138
    %v140 = vsel %vm67, %v121, 0.0
    %v141 = vadd.f32 %v139, %v140
    %v142 = vsel %vm67, %v120, 0.0
    %v143 = vadd.f32 %v141, %v142
    %v144 = vsel %vm67, %v122, 0.0
    %v145 = vadd.f32 %v143, %v144
    %146 = vadd.xlane.f32.xlu0 %v145
    %v147 = vpop.xlane.xlu0 %146
    %v148 = vmul.f32 %v84, 0.0009765625
    %v149 = vmul.f32 %v147, 0.0009765625
    %v150 = vmul.f32 %v148, %v148
    %v151 = vsub.f32 %v149, %v150
    %v152 = vadd.f32 %v151, 1e-06
    %v153 = vrsqrt.pop %v152
    %v156 = vunpack.c.l.s4 269488144
    %v157 = vunpack.c.0.s8 %v156
    %v158 = vlaneseq
    %v159 = vshrl.u32 %v158, 7
    %v160 = vsub.s32 %v157, %v159
    %v161 = vrot.slane %v148, %v160
    %v163 = vsub.f32 %v21, %v161
    %v164 = vsub.f32 %v22, %v161
    %v167 = vunpack.c.l.s4 269488144
    %v168 = vunpack.c.0.s8 %v167
    %v169 = vlaneseq
    %v170 = vshrl.u32 %v169, 7
    %v171 = vsub.s32 %v168, %v170
    %v172 = vrot.slane %v153, %v171
    %v174 = vmul.f32 %v163, %v172
    %v175 = vmul.f32 %v164, %v172
    %176 = vst [vmem:[#allocation5] sm:$0xff] %v174
    %177 = vst [vmem:[#allocation5 + $0x8] sm:$0xff] %v175
    // Predicated region
    $region10: #{tpu_custom_call.1} parent=1 // pred_check
      _
    $region11: #{tpu_custom_call.1} parent=1 // pred_check_branch
      %179 = sbr.rel (0) target = $region13
    $region12: #{tpu_custom_call.1} parent=1 // pred_region
      %s181 = ssub.s32 256, 256
      %182 = vsyncadd [#allocation4], %s181
      %s184 = sshll.u32 [#allocation5], 4
      %s185 = int_to_ptr.vmem [resolvable:$true] %s184
      %187 = dma.vmem_to_hbm [thread:$0]  %s185, 256, %s1, [#allocation4]
    $region13: #{tpu_custom_call.1} parent=1 // pred_fallthru
      _
    // Predicated region
    $region14: #{tpu_custom_call.1} parent=1 // pred_check
      _
    $region15: #{tpu_custom_call.1} parent=1 // pred_check_branch
      %189 = sbr.rel (0) target = $region17
    $region16: #{tpu_custom_call.1} parent=1 // pred_region
      %190 = dma.done [#allocation4], 256
    $region17: #{tpu_custom_call.1} parent=1 // pred_fallthru
      _
    %191 = vsyncpa [#allocation3], 1
    %192 = vsyncpa [#allocation4], 1

</llo_original>
